<compile_context>
chip_gen: v5e
topology: v5e:2x2
jax: 0.10.0
libtpu: 0.0.40
codegen_flags: <defaults>
</compile_context>

<pallas_src>
import functools

import jax
import jax.numpy as jnp
from jax.experimental import pallas as pl
from jax.experimental.pallas import tpu as pltpu

_LANES = 128
_MAX_BLOCK_ROWS = 8192             # per-review cap: f32-footprint safe on v7x
_BLOCK_BYTES = 4 * 1024 * 1024     # general-path per-input VMEM block target
_VMEM_LIMIT = 48 * 1024 * 1024     # <= 48 MiB scoped VMEM (v7x has 64 MiB)


def _round_up(x, m):
    return -(-x // m) * m


def _round_down(x, m):
    return (x // m) * m


def _cdiv(a, b):
    return -(-a // b)


def _sublane_multiple(dtype):
    # Minimum second-to-minor block multiple for packed dtypes (8 f32,
    # 16 bf16, 32 int8/fp8).
    return max(8, 32 // jnp.dtype(dtype).itemsize)


# ----------------------------------------------------------------------------
# Lane-packed kernel (128 % D == 0): inputs reshaped (N, D) -> (R, 128).
# ----------------------------------------------------------------------------
def _euclid_packed_kernel(pred_ref, tgt_ref, sel_ref, out_ref, *,
                          r_valid, block_rows, steps):
    pi = pl.program_id(0)          # megacore-shardable part axis
    i = pl.program_id(1)           # steps within this part

    @pl.when(i == 0)
    def _():
        out_ref[...] = jnp.zeros_like(out_ref)

    # Cast BEFORE subtracting (bf16-safe cancellation; f32 is native VPU).
    diff = pred_ref[...].astype(jnp.float32) - tgt_ref[...].astype(jnp.float32)
    sq = diff * diff                                         # (block_rows, 128)

    # Per-original-row sum of squares via the (otherwise idle) MXU.  sel is
    # VMEM-resident; its columns >= 128//d are all-zero so their sqrt is 0.
    sums = jnp.dot(sq, sel_ref[...], preferred_element_type=jnp.float32)
    # TODO(synk): on v7x with bf16 inputs the full-width f32 sqrt can make the
    # EUP the saturating slot; a bf16 sqrt (2x rate) is a precision trade-off
    # and is intentionally not applied here.
    dist = jnp.sqrt(sums)                                    # (block_rows, 128)

    # Mask packed rows past the valid range (partial last block, and the
    # duplicated clamped block of an uneven 2-way split).
    row0 = (pi * steps + i) * block_rows
    rows = row0 + jax.lax.broadcasted_iota(jnp.int32, (block_rows, 1), 0)
    dist = jnp.where(rows < r_valid, dist, 0.0)

    # Fold to an (8, 128) partial with pure VPU adds; the single
    # cross-lane/sublane reduce + divide happens once in the wrapper.
    out_ref[...] += jnp.sum(dist.reshape(block_rows // 8, 8, _LANES), axis=0)


def _euclid_loss_packed(pred2, tgt2, n, d, row_block_cap=None):
    sub = _sublane_multiple(pred2.dtype)
    pack = _LANES // d

    # Pad only up to the next multiple of the pack factor (< 128 rows) so the
    # lane-packing reshape is valid.  Zero rows contribute dist == 0.
    # TODO(synk): this still materializes one padded copy when N % pack != 0;
    # a fully copy-free tail would need a separate tail kernel.
    rem = n % pack
    if rem:
        pad = pack - rem
        pred2 = jnp.pad(pred2, ((0, pad), (0, 0)))
        tgt2 = jnp.pad(tgt2, ((0, pad), (0, 0)))

    r_valid = pred2.shape[0] // pack                 # valid packed rows
    pred_p = pred2.reshape(r_valid, _LANES)          # free row-major reshape
    tgt_p = tgt2.reshape(r_valid, _LANES)

    block_rows = min(_MAX_BLOCK_ROWS, _round_up(r_valid, sub))
    if row_block_cap is not None:
        block_rows = min(block_rows, max(sub, _round_down(row_block_cap, sub)))
    block_rows = max(sub, block_rows)

    n_blocks = _cdiv(r_valid, block_rows)
    p = 2 if n_blocks >= 2 else 1                    # 2-TC-shardable axis
    steps = _cdiv(n_blocks, p)

    # Constant 0/1 group-sum matrix (64 KiB f32), hoisted out of the kernel;
    # the constant index_map keeps it resident after a single DMA.
    lane = jnp.arange(_LANES, dtype=jnp.int32)
    sel = (lane[:, None] // d == lane[None, :]).astype(jnp.float32)

    if p * steps == n_blocks:
        in_map = lambda pi, i: (pi * steps + i, 0)
    else:
        # Uneven split: clamp so no DMA is fully out of bounds; the in-kernel
        # row mask zeroes the duplicated block's contribution.
        in_map = lambda pi, i: (jnp.minimum(pi * steps + i, n_blocks - 1), 0)

    kernel = functools.partial(_euclid_packed_kernel, r_valid=r_valid,
                               block_rows=block_rows, steps=steps)

    itemsize = jnp.dtype(pred2.dtype).itemsize
    cost = pl.CostEstimate(
        flops=2 * r_valid * _LANES + 2 * r_valid * _LANES * _LANES,
        transcendentals=r_valid * _LANES,
        bytes_accessed=2 * r_valid * _LANES * itemsize + p * 8 * _LANES * 4,
    )

    partials = pl.pallas_call(
        kernel,
        out_shape=jax.ShapeDtypeStruct((p * 8, _LANES), jnp.float32),
        grid_spec=pltpu.PrefetchScalarGridSpec(
            num_scalar_prefetch=0,
            grid=(p, steps),
            in_specs=[
                pl.BlockSpec((block_rows, _LANES), in_map),
                pl.BlockSpec((block_rows, _LANES), in_map),
                pl.BlockSpec((_LANES, _LANES), lambda pi, i: (0, 0)),
            ],
            out_specs=pl.BlockSpec((8, _LANES), lambda pi, i: (pi, 0)),
        ),
        compiler_params=pltpu.CompilerParams(
            # TODO(synk): on v7x switch the leading axis to pltpu.CORE_PARALLEL
            # to guarantee the 2-TensorCore split; "parallel" is kept because
            # it lowers cleanly on every generation.
            dimension_semantics=("parallel", "arbitrary"),
            vmem_limit_bytes=_VMEM_LIMIT,
        ),
        cost_estimate=cost,
    )(pred_p, tgt_p, sel)

    # Single epilogue reduce + divide by the TRUE number of rows.
    return jnp.sum(partials) / jnp.float32(n)


# ----------------------------------------------------------------------------
# General kernel (any D that does not divide 128).
# ----------------------------------------------------------------------------
def _euclid_general_kernel(pred_ref, tgt_ref, out_ref, acc_ref, *,
                           n_valid, tile_n):
    i = pl.program_id(0)

    @pl.when(i == 0)
    def _():
        acc_ref[...] = jnp.zeros_like(acc_ref)

    diff = pred_ref[...].astype(jnp.float32) - tgt_ref[...].astype(jnp.float32)
    ssq = jnp.sum(diff * diff, axis=-1, keepdims=True)        # (tile_n, 1)
    dist = jnp.sqrt(ssq)

    # Mask tail rows of the (possibly partial) last block.
    rows = i * tile_n + jax.lax.broadcasted_iota(jnp.int32, (tile_n, 1), 0)
    dist = jnp.where(rows < n_valid, dist, 0.0)

    # Fold to a tiny (8, 1) partial with VPU adds; one final reduce at the end.
    acc_ref[...] += jnp.sum(dist.reshape(tile_n // 8, 8, 1), axis=0)

    @pl.when(i == pl.num_programs(0) - 1)
    def _():
        out_ref[0, 0] = jnp.sum(acc_ref[...]) / jnp.float32(n_valid)


def _euclid_loss_general(pred2, tgt2, n, d, row_block_cap=None):
    sub = _sublane_multiple(pred2.dtype)

    # VMEM budget per row must use the lane-padded width (round_up(d, 128))
    # and f32 element size (in-kernel temporaries are f32), not d * itemsize.
    lanes_pad = _round_up(d, _LANES)
    tile_n = _BLOCK_BYTES // (lanes_pad * 4)
    tile_n = min(_MAX_BLOCK_ROWS, _round_down(tile_n, sub), _round_up(n, sub))
    if row_block_cap is not None:
        tile_n = min(tile_n, max(sub, _round_down(row_block_cap, sub)))
    tile_n = max(sub, tile_n)

    steps = _cdiv(n, tile_n)
    kernel = functools.partial(_euclid_general_kernel, n_valid=n, tile_n=tile_n)

    itemsize = jnp.dtype(pred2.dtype).itemsize
    cost = pl.CostEstimate(
        flops=3 * n * d,
        transcendentals=n,
        bytes_accessed=2 * n * d * itemsize + 4,
    )

    out = pl.pallas_call(
        kernel,
        out_shape=jax.ShapeDtypeStruct((1, 1), jnp.float32),
        grid_spec=pltpu.PrefetchScalarGridSpec(
            num_scalar_prefetch=0,
            grid=(steps,),
            in_specs=[
                pl.BlockSpec((tile_n, d), lambda i: (i, 0)),
                pl.BlockSpec((tile_n, d), lambda i: (i, 0)),
            ],
            out_specs=pl.BlockSpec((1, 1), lambda i: (0, 0)),
            scratch_shapes=[pltpu.VMEM((8, 1), jnp.float32)],
        ),
        compiler_params=pltpu.CompilerParams(
            dimension_semantics=("arbitrary",),
            vmem_limit_bytes=_VMEM_LIMIT,
        ),
        cost_estimate=cost,
    )(pred2, tgt2)
    return out[0, 0]


# ----------------------------------------------------------------------------
# Public wrapper — Euclidean_loss.forward(pred, target).
# ----------------------------------------------------------------------------
def euclidean_loss(pred, target, *, _row_block_cap=None):
    assert pred.shape == target.shape
    d = pred.shape[-1]
    pred2 = pred.reshape(-1, d)
    tgt2 = target.reshape(-1, d)
    n = pred2.shape[0]

    if d <= _LANES and _LANES % d == 0:
        return _euclid_loss_packed(pred2, tgt2, n, d, _row_block_cap)
    # TODO(synk): D values that do not divide 128 (e.g. 24) could be
    # zero-padded up to the next divisor of 128 and reuse the lane-packed
    # path, at the cost of one padded-copy HBM pass; kept on the general
    # (lane-sparse but VMEM-correct) path for now.
    return _euclid_loss_general(pred2, tgt2, n, d, _row_block_cap)


def _ref_loss(pred, target):
    pred = pred.astype(jnp.float32)
    target = target.astype(jnp.float32)
    return jnp.mean(jnp.sqrt(jnp.sum((pred - target) ** 2, axis=-1)))


if __name__ == "__main__":
    key = jax.random.PRNGKey(0)
    keys = jax.random.split(key, 12)

    # 1) Demo shape: lane-packed path, aligned N (no pad, single block).
    p1 = jax.random.normal(keys[0], (2, 4, 16, 16), dtype=jnp.float32)
    t1 = jax.random.normal(keys[1], (2, 4, 16, 16), dtype=jnp.float32)
    l1 = euclidean_loss(p1, t1)
    jax.block_until_ready(l1)
    assert jnp.allclose(l1, _ref_loss(p1, t1), rtol=1e-5, atol=1e-5), l1

    # 2) Lane-packed, N not a multiple of the pack factor (tiny pad + mask).
    p2 = jax.random.normal(keys[2], (5, 7, 16), dtype=jnp.float32)
    t2 = jax.random.normal(keys[3], (5, 7, 16), dtype=jnp.float32)
    l2 = euclidean_loss(p2, t2)
    jax.block_until_ready(l2)
    assert jnp.allclose(l2, _ref_loss(p2, t2), rtol=1e-5, atol=1e-5), l2

    # 3) General path (D = 24 does not divide 128), partial block + mask.
    p3 = jax.random.normal(keys[4], (3, 10, 24), dtype=jnp.float32)
    t3 = jax.random.normal(keys[5], (3, 10, 24), dtype=jnp.float32)
    l3 = euclidean_loss(p3, t3)
    jax.block_until_ready(l3)
    assert jnp.allclose(l3, _ref_loss(p3, t3), rtol=1e-5, atol=1e-5), l3

    # 4) Lane-packed, multi-block grid: 2-way part split, uneven (clamped)
    #    block count and a partial last block (small forced block size).
    p4 = jax.random.normal(keys[6], (37, 4, 16), dtype=jnp.float32)
    t4 = jax.random.normal(keys[7], (37, 4, 16), dtype=jnp.float32)
    l4 = euclidean_loss(p4, t4, _row_block_cap=8)
    jax.block_until_ready(l4)
    assert jnp.allclose(l4, _ref_loss(p4, t4), rtol=1e-5, atol=1e-5), l4

    # 5) General path, multi-step accumulation with a partial last block.
    p5 = jax.random.normal(keys[8], (70, 24), dtype=jnp.float32)
    t5 = jax.random.normal(keys[9], (70, 24), dtype=jnp.float32)
    l5 = euclidean_loss(p5, t5, _row_block_cap=16)
    jax.block_until_ready(l5)
    assert jnp.allclose(l5, _ref_loss(p5, t5), rtol=1e-5, atol=1e-5), l5

    # 6) bf16 inputs on the packed path (16-row sublane multiple, f32 math).
    p6 = jax.random.normal(keys[10], (2, 4, 16, 16), dtype=jnp.bfloat16)
    t6 = jax.random.normal(keys[11], (2, 4, 16, 16), dtype=jnp.bfloat16)
    l6 = euclidean_loss(p6, t6)
    jax.block_until_ready(l6)
    assert jnp.allclose(l6, _ref_loss(p6, t6), rtol=1e-4, atol=1e-4), l6

    print("KERNEL_OK")
</pallas_src>

<mosaic_0001>
module attributes {stable_mosaic.version = 11 : i64} {
  func.func @_euclid_packed_kernel(%arg0: i32, %arg1: i32, %arg2: memref<16x128xf32, #tpu.memory_space<vmem>>, %arg3: memref<16x128xf32, #tpu.memory_space<vmem>>, %arg4: memref<128x128xf32, #tpu.memory_space<vmem>>, %arg5: memref<8x128xf32, #tpu.memory_space<vmem>>) attributes {dimension_semantics = [#tpu.dimension_semantics<parallel>, #tpu.dimension_semantics<arbitrary>], iteration_bounds = array<i64: 1, 1>, scalar_prefetch = 0 : i64, scratch_operands = 0 : i64, tpu.core_type = #tpu.core_type<tc>, window_params = [{transform_indices = @transform_0, window_bounds = array<i64: 16, 128>}, {transform_indices = @transform_1, window_bounds = array<i64: 16, 128>}, {pipeline_mode = #tpu.pipeline_mode<synchronous>, transform_indices = @transform_2, window_bounds = array<i64: 128, 128>}, {transform_indices = @transform_3, window_bounds = array<i64: 8, 128>}]} {
    %c0_i32 = arith.constant 0 : i32
    %0 = arith.cmpi eq, %arg1, %c0_i32 : i32
    %1 = arith.extui %0 : i1 to i32
    %c0_i32_0 = arith.constant 0 : i32
    %2 = arith.cmpi ne, %1, %c0_i32_0 : i32
    scf.if %2 {
      %cst_13 = arith.constant 0.000000e+00 : f32
      %27 = vector.broadcast %cst_13 : f32 to vector<8x128xf32>
      %c0_14 = arith.constant 0 : index
      %c0_15 = arith.constant 0 : index
      %28 = vector.load %arg5[%c0_14, %c0_15] : memref<8x128xf32, #tpu.memory_space<vmem>>, vector<8x128xf32>
      tpu.vector_store %arg5[%c0_14, %c0_15], %27 {strides = array<i32>} : memref<8x128xf32, #tpu.memory_space<vmem>>, vector<8x128xf32>,
    } else {
    }
    %c0 = arith.constant 0 : index
    %c0_1 = arith.constant 0 : index
    %3 = vector.load %arg2[%c0, %c0_1] : memref<16x128xf32, #tpu.memory_space<vmem>>, vector<16x128xf32>
    %c0_2 = arith.constant 0 : index
    %c0_3 = arith.constant 0 : index
    %4 = vector.load %arg3[%c0_2, %c0_3] : memref<16x128xf32, #tpu.memory_space<vmem>>, vector<16x128xf32>
    %5 = arith.subf %3, %4 : vector<16x128xf32>
    %6 = arith.mulf %5, %5 : vector<16x128xf32>
    %c0_4 = arith.constant 0 : index
    %c0_5 = arith.constant 0 : index
    %7 = vector.load %arg4[%c0_4, %c0_5] : memref<128x128xf32, #tpu.memory_space<vmem>>, vector<128x128xf32>
    %cst = arith.constant dense<0.000000e+00> : vector<16x128xf32>
    %8 = tpu.matmul %6, %7, %cst {dimension_numbers = #tpu.dot_dimension_numbers<[1], [0], [0], [1], [0, 0, 1, 1], [], []>} : vector<16x128xf32>, vector<128x128xf32>, vector<16x128xf32> -> vector<16x128xf32>
    %9 = math.sqrt %8 : vector<16x128xf32>
    %c1_i32 = arith.constant 1 : i32
    %10 = arith.muli %arg0, %c1_i32 : i32
    %11 = arith.addi %10, %arg1 : i32
    %c16_i32 = arith.constant 16 : i32
    %12 = arith.muli %11, %c16_i32 : i32
    %13 = tpu.iota {dimensions = array<i32: 0>} : vector<16x1xi32>
    %14 = vector.broadcast %12 : i32 to vector<16x1xi32>
    %15 = arith.addi %14, %13 : vector<16x1xi32>
    %c16_i32_6 = arith.constant 16 : i32
    %16 = vector.broadcast %c16_i32_6 : i32 to vector<16x1xi32>
    %17 = arith.cmpi slt, %15, %16 : vector<16x1xi32>
    %cst_7 = arith.constant 0.000000e+00 : f32
    %18 = vector.shape_cast %17 : vector<16x1xi1> to vector<16x1xi1>
    %19 = vector.broadcast %18 : vector<16x1xi1> to vector<16x128xi1>
    %20 = vector.broadcast %cst_7 : f32 to vector<16x128xf32>
    %21 = arith.select %19, %9, %20 : vector<16x128xi1>, vector<16x128xf32>
    %c0_8 = arith.constant 0 : index
    %c0_9 = arith.constant 0 : index
    %22 = vector.load %arg5[%c0_8, %c0_9] : memref<8x128xf32, #tpu.memory_space<vmem>>, vector<8x128xf32>
    %23 = vector.shape_cast %21 : vector<16x128xf32> to vector<2x8x128xf32>
    %cst_10 = arith.constant dense<0.000000e+00> : vector<8x128xf32>
    %24 = vector.multi_reduction <add>, %23, %cst_10 [0] : vector<2x8x128xf32> to vector<8x128xf32>
    %25 = arith.addf %22, %24 : vector<8x128xf32>
    %c0_11 = arith.constant 0 : index
    %c0_12 = arith.constant 0 : index
    %26 = vector.load %arg5[%c0_11, %c0_12] : memref<8x128xf32, #tpu.memory_space<vmem>>, vector<8x128xf32>
    tpu.vector_store %arg5[%c0_11, %c0_12], %25 {strides = array<i32>} : memref<8x128xf32, #tpu.memory_space<vmem>>, vector<8x128xf32>,
    return
  }
  func.func @transform_0(%arg0: i32, %arg1: i32) -> (i32, i32) {
    %c1_i32 = arith.constant 1 : i32
    %0 = arith.muli %arg0, %c1_i32 : i32
    %1 = arith.addi %0, %arg1 : i32
    %c0_i32 = arith.constant 0 : i32
    %c0_i32_0 = arith.constant 0 : i32
    return %1, %c0_i32 : i32, i32
  }
  func.func @transform_1(%arg0: i32, %arg1: i32) -> (i32, i32) {
    %c1_i32 = arith.constant 1 : i32
    %0 = arith.muli %arg0, %c1_i32 : i32
    %1 = arith.addi %0, %arg1 : i32
    %c0_i32 = arith.constant 0 : i32
    %c0_i32_0 = arith.constant 0 : i32
    return %1, %c0_i32 : i32, i32
  }
  func.func @transform_2(%arg0: i32, %arg1: i32) -> (i32, i32) {
    %c0_i32 = arith.constant 0 : i32
    %c0_i32_0 = arith.constant 0 : i32
    %c0_i32_1 = arith.constant 0 : i32
    return %c0_i32, %c0_i32_0 : i32, i32
  }
  func.func @transform_3(%arg0: i32, %arg1: i32) -> (i32, i32) {
    %c0_i32 = arith.constant 0 : i32
    %c0_i32_0 = arith.constant 0 : i32
    return %arg0, %c0_i32 : i32, i32
  }
}

</mosaic_0001>

<llo_original>
// kernel: tpu_custom_call.1
$region0: #{tpu_custom_call.1}
  #allocation0 [shape = 'u32[]', space=smem, size = 0x4, offset = 0x4, fixed_abs, tag = 'smem constant byte address 0x4 - core index']
  #allocation1 [shape = 'u32[72,128]{1,0:T(1,128)}', space=vmem, size = 0x9000, scoped, tag = 'internal scratch']
  %s0 = inlined_call_operand.hbm [shape: f32[16,128], index: 0, kind: input, shape index: {}]
  %s1 = inlined_call_operand.hbm [shape: f32[16,128], index: 1, kind: input, shape index: {}]
  %s2 = inlined_call_operand.hbm [shape: f32[128,128], index: 2, kind: input, shape index: {}]
  %s3 = inlined_call_operand.hbm [shape: f32[8,128], index: 3, kind: output, shape index: {}]
  %s4 = sld [smem:[#allocation0]]
  $region38: #{tpu_custom_call.1} parent=0
    _
  %s6 = ssub.s32 1, %s4
  %s7 = scalar_select 0, %s6, %s4
  $region1: #{tpu_custom_call.1} parent=0
    #allocation2 [shape = 'u8[8192]{0}', space=vmem, size = 0x2000, scoped, tag = 'input window, operand 0, single buffered']
    #allocation3 [shape = 's32[1]{0}', space=sflag, size = 0x4, scoped, tag = 'scoped memory for tpu_custom_call.1']
    #allocation4 [shape = 's32[1]{0}', space=sflag, size = 0x4, scoped, tag = 'scoped memory for tpu_custom_call.1']
    #allocation5 [shape = 'u8[8192]{0}', space=vmem, size = 0x2000, scoped, tag = 'input window, operand 1, single buffered']
    #allocation6 [shape = 's32[1]{0}', space=sflag, size = 0x4, scoped, tag = 'scoped memory for tpu_custom_call.1']
    #allocation7 [shape = 'u8[65536]{0}', space=vmem, size = 0x10000, scoped, tag = 'input window, operand 2, single buffered']
    #allocation8 [shape = 'u8[4096]{0}', space=vmem, size = 0x1000, scoped, tag = 'output window, operand 0, single buffered']
    %8 = vsyncpa [#allocation3], 0
    %9 = vsyncpa [#allocation6], 0
    %10 = vsyncpa [#allocation4], 0
    // Predicated region
    $region2: #{tpu_custom_call.1} parent=1 // pred_check
      _
    $region3: #{tpu_custom_call.1} parent=1 // pred_check_branch
      %12 = sbr.rel (0) target = $region5
    $region4: #{tpu_custom_call.1} parent=1 // pred_region
      %s13 = sadd.s32 0, 0
      %s14 = smul.u32 2, %s13
      %16 = vsyncadd [#allocation3], 0
      %s17 = smul.addr %s14, 8
      %s18 = scalar_lea.hbm %s0, %s17
      %s19 = sshll.u32 %s18, 4
      %s20 = int_to_ptr.hbm [resolvable:$true] %s19
      %s21 = sshll.u32 [#allocation2], 4
      %s22 = int_to_ptr.vmem [resolvable:$true] %s21
      %27 = dma.hbm_to_vmem [thread:$0]  %s20, 256, %s22, [#allocation3], 128, 128, 8
    $region5: #{tpu_custom_call.1} parent=1 // pred_fallthru
      _
    // Predicated region
    $region6: #{tpu_custom_call.1} parent=1 // pred_check
      _
    $region7: #{tpu_custom_call.1} parent=1 // pred_check_branch
      %29 = sbr.rel (0) target = $region9
    $region8: #{tpu_custom_call.1} parent=1 // pred_region
      %s30 = sadd.s32 0, 0
      %s31 = smul.u32 2, %s30
      %33 = vsyncadd [#allocation6], 0
      %s34 = smul.addr %s31, 8
      %s35 = scalar_lea.hbm %s1, %s34
      %s36 = sshll.u32 %s35, 4
      %s37 = int_to_ptr.hbm [resolvable:$true] %s36
      %s38 = sshll.u32 [#allocation5], 4
      %s39 = int_to_ptr.vmem [resolvable:$true] %s38
      %44 = dma.hbm_to_vmem [thread:$0]  %s37, 256, %s39, [#allocation6], 128, 128, 8
    $region9: #{tpu_custom_call.1} parent=1 // pred_fallthru
      _
    // Predicated region
    $region10: #{tpu_custom_call.1} parent=1 // pred_check
      _
    $region11: #{tpu_custom_call.1} parent=1 // pred_check_branch
      %46 = sbr.rel (0) target = $region13
    $region12: #{tpu_custom_call.1} parent=1 // pred_region
      %48 = vsyncadd [#allocation6], 0
      %s49 = sshll.u32 %s2, 4
      %s50 = int_to_ptr.hbm [resolvable:$true] %s49
      %s51 = sshll.u32 [#allocation7], 4
      %s52 = int_to_ptr.vmem [resolvable:$true] %s51
      %57 = dma.hbm_to_vmem [thread:$0]  %s50, 2048, %s52, [#allocation6], 128, 128, 8
    $region13: #{tpu_custom_call.1} parent=1 // pred_fallthru
      _
    // Predicated region
    $region14: #{tpu_custom_call.1} parent=1 // pred_check
      _
    $region15: #{tpu_custom_call.1} parent=1 // pred_check_branch
      %59 = sbr.rel (0) target = $region17
    $region16: #{tpu_custom_call.1} parent=1 // pred_region
      %61 = dma.done [#allocation3], 256
    $region17: #{tpu_custom_call.1} parent=1 // pred_fallthru
      _
    // Predicated region
    $region18: #{tpu_custom_call.1} parent=1 // pred_check
      _
    $region19: #{tpu_custom_call.1} parent=1 // pred_check_branch
      %63 = sbr.rel (0) target = $region21
    $region20: #{tpu_custom_call.1} parent=1 // pred_region
      %65 = dma.done [#allocation6], 256
    $region21: #{tpu_custom_call.1} parent=1 // pred_fallthru
      _
    // Predicated region
    $region22: #{tpu_custom_call.1} parent=1 // pred_check
      _
    $region23: #{tpu_custom_call.1} parent=1 // pred_check_branch
      %67 = sbr.rel (0) target = $region25
    $region24: #{tpu_custom_call.1} parent=1 // pred_region
      %69 = dma.done [#allocation6], 2048
    $region25: #{tpu_custom_call.1} parent=1 // pred_fallthru
      _
    %s70 = sadd.s32 0, 0
    %s71 = smul.u32 2, %s70
    %s72 = sadd.s32 0, 0
    %s73 = smul.u32 2, %s72
    %p74 = scmp.eq.s32.totalorder 0, 0
    // Predicated region
    $region26: #{tpu_custom_call.1} parent=1 // pred_check
      %p75 = pneg %p74
    $region27: #{tpu_custom_call.1} parent=1 // pred_check_branch
      %77 = sbr.rel (%p75) target = $region29
    $region28: #{tpu_custom_call.1} parent=1 // pred_region
      %78 = vst [vmem:[#allocation8] sm:$0xff] 0.0
    $region29: #{tpu_custom_call.1} parent=1 // pred_fallthru
      _
    %v79 = vld [vmem:[#allocation2] sm:$0xff]
    %v80 = vld [vmem:[#allocation2 + $0x8] sm:$0xff]
    %v81 = vld [vmem:[#allocation5] sm:$0xff]
    %v82 = vld [vmem:[#allocation5 + $0x8] sm:$0xff]
    %v83 = vsub.f32 %v79, %v81
    %v84 = vsub.f32 %v80, %v82
    %v85 = vmul.f32 %v83, %v83
    %v86 = vmul.f32 %v84, %v84
    %v87 = vld [vmem:[#allocation7] sm:$0xff]
    %v88 = vld [vmem:[#allocation7 + $0x8] sm:$0xff]
    %v89 = vld [vmem:[#allocation7 + $0x10] sm:$0xff]
    %v90 = vld [vmem:[#allocation7 + $0x18] sm:$0xff]
    %v91 = vld [vmem:[#allocation7 + $0x20] sm:$0xff]
    %v92 = vld [vmem:[#allocation7 + $0x28] sm:$0xff]
    %v93 = vld [vmem:[#allocation7 + $0x30] sm:$0xff]
    %v94 = vld [vmem:[#allocation7 + $0x38] sm:$0xff]
    %v95 = vld [vmem:[#allocation7 + $0x40] sm:$0xff]
    %v96 = vld [vmem:[#allocation7 + $0x48] sm:$0xff]
    %v97 = vld [vmem:[#allocation7 + $0x50] sm:$0xff]
    %v98 = vld [vmem:[#allocation7 + $0x58] sm:$0xff]
    %v99 = vld [vmem:[#allocation7 + $0x60] sm:$0xff]
    %v100 = vld [vmem:[#allocation7 + $0x68] sm:$0xff]
    %v101 = vld [vmem:[#allocation7 + $0x70] sm:$0xff]
    %v102 = vld [vmem:[#allocation7 + $0x78] sm:$0xff]
    %103 = vmatpush.msra.mxu0 %v102
    %104 = vmatpush.msra.mxu0 %v101
    %105 = vmatpush.msra.mxu0 %v100
    %106 = vmatpush.msra.mxu0 %v99
    %107 = vmatpush.msra.mxu0 %v98
    %108 = vmatpush.msra.mxu0 %v97
    %109 = vmatpush.msra.mxu0 %v96
    %110 = vmatpush.msra.mxu0 %v95
    %111 = vmatpush.msra.mxu0 %v94
    %112 = vmatpush.msra.mxu0 %v93
    %113 = vmatpush.msra.mxu0 %v92
    %114 = vmatpush.msra.mxu0 %v91
    %115 = vmatpush.msra.mxu0 %v90
    %116 = vmatpush.msra.mxu0 %v89
    %117 = vmatpush.msra.mxu0 %v88
    %118 = vmatpush.msra.mxu0 %v87
    %119 = vmatmul.f32.gmra.mxu0 %v85
    %v120 = vpop.f32.mrf.mxu0
    %v121 = vadd.f32 0.0, %v120
    %122 = vmatmul.f32.gmra.mxu0 %v86
    %v123 = vpop.f32.mrf.mxu0
    %v124 = vadd.f32 0.0, %v123
    %125 = vdwg.mxu0
    %v126 = vrsqrt.pop %v121
    %v127 = vmul.f32 %v126, %v121
    %v128 = vmul.f32 %v127, %v126
    %v129 = vmul.f32 0.5, %v128
    %v130 = vsub.f32 1.5, %v129
    %v131 = vmul.f32 %v126, %v130
    %v132 = vmul.f32 %v121, %v131
    %vm133 = vcmp.eq.f32.partialorder %v121, inf
    %v134 = vsel %vm133, %v121, %v132
    %vm135 = vcmp.eq.f32.partialorder %v121, 0.0
    %v136 = vand.u32 %v121, 2147483648
    %v137 = vsel %vm135, %v136, %v134
    %v138 = vrsqrt.pop %v124
    %v139 = vmul.f32 %v138, %v124
    %v140 = vmul.f32 %v139, %v138
    %v141 = vmul.f32 0.5, %v140
    %v142 = vsub.f32 1.5, %v141
    %v143 = vmul.f32 %v138, %v142
    %v144 = vmul.f32 %v124, %v143
    %vm145 = vcmp.eq.f32.partialorder %v124, inf
    %v146 = vsel %vm145, %v124, %v144
    %vm147 = vcmp.eq.f32.partialorder %v124, 0.0
    %v148 = vand.u32 %v124, 2147483648
    %v149 = vsel %vm147, %v148, %v146
    %s150 = sadd.s32 0, 0
    %s151 = smul.u32 %s150, 16
    %v152 = vlaneseq
    %v153 = vshrl.u32 %v152, 7
    %v154 = vadd.s32 %v153, 8
    %v155 = vstv %s151
    %v156 = vadd.s32 %v155, %v153
    %v157 = vadd.s32 %v155, %v154
    %vm158 = vcmp.lt.s32.totalorder %v156, 16
    %vm159 = vcmp.lt.s32.totalorder %v157, 16
    %v160 = vsel %vm158, 1, 0
    %v161 = vsel %vm159, 1, 0
    %vm162 = vcmp.eq.s32.totalorder %v160, 1
    %vm163 = vcmp.eq.s32.totalorder %v161, 1
    %v164 = vsel %vm162, %v137, 0.0
    %v165 = vsel %vm163, %v149, 0.0
    %v166 = vld [vmem:[#allocation8] sm:$0xff]
    %v167 = vadd.f32 %v164, %v165
    %v168 = vadd.f32 %v166, %v167
    %169 = vst [vmem:[#allocation8] sm:$0xff] %v168
    // Predicated region
    $region30: #{tpu_custom_call.1} parent=1 // pred_check
      _
    $region31: #{tpu_custom_call.1} parent=1 // pred_check_branch
      %171 = sbr.rel (0) target = $region33
    $region32: #{tpu_custom_call.1} parent=1 // pred_region
      %173 = vsyncadd [#allocation4], 0
      %s175 = sshll.u32 [#allocation8], 4
      %s176 = int_to_ptr.vmem [resolvable:$true] %s175
      %s177 = sshll.u32 %s3, 4
      %s178 = int_to_ptr.hbm [resolvable:$true] %s177
      %180 = dma.vmem_to_hbm [thread:$0]  %s176, 128, %s178, [#allocation4]
    $region33: #{tpu_custom_call.1} parent=1 // pred_fallthru
      _
    // Predicated region
    $region34: #{tpu_custom_call.1} parent=1 // pred_check
      _
    $region35: #{tpu_custom_call.1} parent=1 // pred_check_branch
      %182 = sbr.rel (0) target = $region37
    $region36: #{tpu_custom_call.1} parent=1 // pred_region
      %184 = dma.done [#allocation4], 128
    $region37: #{tpu_custom_call.1} parent=1 // pred_fallthru
      _
    %185 = vsyncpa [#allocation3], 1
    %186 = vsyncpa [#allocation6], 1
    %187 = vsyncpa [#allocation4], 1

</llo_original>
